<compile_context>
chip_gen: v7x
topology: tpu7x:2x2x1
jax: 0.10.0
libtpu: 0.0.40
codegen_flags: <defaults>
</compile_context>

<pallas_src>
import jax
import jax.numpy as jnp
from jax.experimental import pallas as pl
from jax.experimental.pallas import tpu as pltpu

_LANES = 128
# Dtype-aware sublane packing: f32 -> 8 rows/vreg, bf16 -> 16, int8/fp8 -> 32.
_SUBLANE_MULT = {4: 8, 2: 16, 1: 32}
# Target ~4 MiB tiles: double-buffered in + out stays ~16 MiB, comfortably
# within the default scoped VMEM limit on v5e/v6e (32/128 MiB) and v7x (32/64 MiB).
_TARGET_TILE_BYTES = 4 * 1024 * 1024


def _copy_kernel(x_ref, o_ref):
    # Pure pass-through of the current block.
    o_ref[...] = x_ref[...]


def _identity_copy(x):
    """Materialized identity copy through a Pallas kernel (lane-dense, tiled)."""
    orig_shape = x.shape
    n = x.size
    itemsize = jnp.dtype(x.dtype).itemsize

    if n % _LANES != 0:
        # Fallback: whole array as one VMEM-resident block (small arrays only).
        return pl.pallas_call(
            _copy_kernel,
            out_shape=jax.ShapeDtypeStruct(orig_shape, x.dtype),
            input_output_aliases={0: 0},
        )(x)

    rows = n // _LANES
    x2 = x.reshape(rows, _LANES)  # lane-dense 2-D view, reshape is free in XLA

    sub_mult = _SUBLANE_MULT.get(itemsize, 8)
    target_rows = max(sub_mult, _TARGET_TILE_BYTES // (_LANES * itemsize))
    if rows <= target_rows:
        # Full-extent block is always layout-legal, even if rows % 8 != 0.
        tile_rows = rows
    else:
        tile_rows = (target_rows // sub_mult) * sub_mult

    grid = (pl.cdiv(rows, tile_rows),)

    y2 = pl.pallas_call(
        _copy_kernel,
        out_shape=jax.ShapeDtypeStruct((rows, _LANES), x.dtype),
        grid=grid,
        in_specs=[pl.BlockSpec((tile_rows, _LANES), lambda i: (i, 0))],
        out_specs=pl.BlockSpec((tile_rows, _LANES), lambda i: (i, 0)),
        input_output_aliases={0: 0},
        compiler_params=pltpu.CompilerParams(
            # Parallel row axis: shards across both TensorCores on v7x,
            # measured no-op on v5e/v6e so it's free to keep.
            dimension_semantics=("parallel",)
        ),
    )(x2)
    return y2.reshape(orig_shape)


def identity_norm(x, embedding=None, *, materialize_copy=False):
    """Pallas/JAX equivalent of IdentityNorm.forward.

    Args:
      x: jnp array (any shape) or a tuple (returned unchanged, like torch).
      embedding: must be None (matches the PyTorch assert).
      materialize_copy: if True, route through an optimized Pallas copy kernel
        (only useful when an explicit kernel boundary is required); default is
        the zero-cost pass-through, which is the correct "optimization" for a
        no-op module.
    """
    if isinstance(x, tuple):
        return x
    assert embedding is None
    if not materialize_copy:
        # Fastest possible implementation: no kernel launch, no HBM traffic.
        return x
    return _identity_copy(x)


if __name__ == "__main__":
    key = jax.random.PRNGKey(0)
    # IdentityNorm has no parameters (d_model is ignored in __init__).
    B, T, D = 2, 8, 32  # batch=2, seq=8, hidden=32
    x = jax.random.normal(key, (B, T, D), dtype=jnp.float32)

    # Default fast path: identity → return input, no kernel launched.
    y_fast = identity_norm(x)
    assert y_fast is x

    # Explicit Pallas copy path (kernel boundary required case).
    y = identity_norm(x, materialize_copy=True)
    y = jax.block_until_ready(y)
    assert y.shape == x.shape and y.dtype == x.dtype
    assert bool(jnp.all(y == x))

    # Tuple pass-through semantics (matches torch module).
    t_in = (x, x)
    t_out = identity_norm(t_in)
    assert t_out is t_in

    print("KERNEL_OK")
</pallas_src>

<mosaic_0001>
module attributes {stable_mosaic.version = 11 : i64} {
  func.func @_copy_kernel(%arg0: i32, %arg1: memref<4x128xf32, #tpu.memory_space<vmem>>, %arg2: memref<4x128xf32, #tpu.memory_space<vmem>>) attributes {dimension_semantics = [#tpu.dimension_semantics<parallel>], iteration_bounds = array<i64: 1>, scalar_prefetch = 0 : i64, scratch_operands = 0 : i64, tpu.core_type = #tpu.core_type<tc>, window_params = [{transform_indices = @transform_0, window_bounds = array<i64: 4, 128>}, {transform_indices = @transform_1, window_bounds = array<i64: 4, 128>}]} {
    %c0 = arith.constant 0 : index
    %c0_0 = arith.constant 0 : index
    %0 = vector.load %arg1[%c0, %c0_0] : memref<4x128xf32, #tpu.memory_space<vmem>>, vector<4x128xf32>
    %c0_1 = arith.constant 0 : index
    %c0_2 = arith.constant 0 : index
    %1 = vector.load %arg2[%c0_1, %c0_2] : memref<4x128xf32, #tpu.memory_space<vmem>>, vector<4x128xf32>
    tpu.vector_store %arg2[%c0_1, %c0_2], %0 {strides = array<i32>} : memref<4x128xf32, #tpu.memory_space<vmem>>, vector<4x128xf32>,
    return
  }
  func.func @transform_0(%arg0: i32) -> (i32, i32) {
    %c0_i32 = arith.constant 0 : i32
    %c0_i32_0 = arith.constant 0 : i32
    return %arg0, %c0_i32 : i32, i32
  }
  func.func @transform_1(%arg0: i32) -> (i32, i32) {
    %c0_i32 = arith.constant 0 : i32
    %c0_i32_0 = arith.constant 0 : i32
    return %arg0, %c0_i32 : i32, i32
  }
}

</mosaic_0001>

<llo_original>
// kernel: tpu_custom_call.1
$region0: #{tpu_custom_call.1}
  #allocation0 [shape = 'u32[]', space=smem, size = 0x4, offset = 0x4, fixed_abs, tag = 'smem constant byte address 0x4 - core index']
  #allocation1 [shape = 'u32[144,128]{1,0:T(1,128)}', space=vmem, size = 0x12000, scoped, tag = 'internal scratch']
  %s0 = inlined_call_operand.hbm [shape: f32[4,128], index: 0, kind: input, shape index: {}, may-alias: {0,1}]
  %s1 = inlined_call_operand.hbm [shape: f32[4,128], index: 1, kind: output, shape index: {}, may-alias: {0,1}]
  %s2 = sld [smem:[#allocation0]]
  $region18: #{tpu_custom_call.1} parent=0
    _
  %s4 = ssub.s32 1, %s2
  %s5 = scalar_select 0, %s4, %s2
  $region1: #{tpu_custom_call.1} parent=0
    #allocation2 [shape = 'u8[2048]{0}', space=vmem, size = 0x800, scoped, tag = 'input window, operand 0, single buffered']
    #allocation3 [shape = 's32[1]{0}', space=sflag, size = 0x4, scoped, tag = 'scoped memory for tpu_custom_call.1']
    #allocation4 [shape = 's32[1]{0}', space=sflag, size = 0x4, scoped, tag = 'scoped memory for tpu_custom_call.1']
    #allocation5 [shape = 'u8[2048]{0}', space=vmem, size = 0x800, scoped, tag = 'output window, operand 0, single buffered']
    %6 = vsyncpa [#allocation3], 0
    %7 = vsyncpa [#allocation4], 0
    // Predicated region
    $region2: #{tpu_custom_call.1} parent=1 // pred_check
      _
    $region3: #{tpu_custom_call.1} parent=1 // pred_check_branch
      %9 = sbr.rel (0) target = $region5
    $region4: #{tpu_custom_call.1} parent=1 // pred_region
      %s11 = ssub.s32 64, 64
      %12 = vsyncadd [#allocation3], %s11
      %s14 = sshll.u32 [#allocation2], 4
      %s15 = int_to_ptr.vmem [resolvable:$true] %s14
      %17 = dma.hbm_to_vmem [thread:$0]  %s0, 64, %s15, [#allocation3]
    $region5: #{tpu_custom_call.1} parent=1 // pred_fallthru
      _
    // Predicated region
    $region6: #{tpu_custom_call.1} parent=1 // pred_check
      _
    $region7: #{tpu_custom_call.1} parent=1 // pred_check_branch
      %19 = sbr.rel (0) target = $region9
    $region8: #{tpu_custom_call.1} parent=1 // pred_region
      %20 = dma.done [#allocation3], 64
    $region9: #{tpu_custom_call.1} parent=1 // pred_fallthru
      _
    %v21 = vld [vmem:[#allocation2] sm:$0xf]
    %22 = vst [vmem:[#allocation5] sm:$0xf] %v21
    // Predicated region
    $region10: #{tpu_custom_call.1} parent=1 // pred_check
      _
    $region11: #{tpu_custom_call.1} parent=1 // pred_check_branch
      %24 = sbr.rel (0) target = $region13
    $region12: #{tpu_custom_call.1} parent=1 // pred_region
      %s26 = ssub.s32 64, 64
      %27 = vsyncadd [#allocation4], %s26
      %s29 = sshll.u32 [#allocation5], 4
      %s30 = int_to_ptr.vmem [resolvable:$true] %s29
      %32 = dma.vmem_to_hbm [thread:$0]  %s30, 64, %s1, [#allocation4]
    $region13: #{tpu_custom_call.1} parent=1 // pred_fallthru
      _
    // Predicated region
    $region14: #{tpu_custom_call.1} parent=1 // pred_check
      _
    $region15: #{tpu_custom_call.1} parent=1 // pred_check_branch
      %34 = sbr.rel (0) target = $region17
    $region16: #{tpu_custom_call.1} parent=1 // pred_region
      %35 = dma.done [#allocation4], 64
    $region17: #{tpu_custom_call.1} parent=1 // pred_fallthru
      _
    %36 = vsyncpa [#allocation3], 1
    %37 = vsyncpa [#allocation4], 1

</llo_original>
